<compile_context>
chip_gen: v7x
topology: tpu7x:2x2x1
jax: 0.10.0
libtpu: 0.0.40
codegen_flags: <defaults>
</compile_context>

<pallas_src>
import functools

import jax
import jax.numpy as jnp
from jax.experimental import pallas as pl
from jax.experimental.pallas import tpu as pltpu


def _round_up(x: int, m: int) -> int:
    return (x + m - 1) // m * m


def _tpu_generation() -> int:
    """Best-effort TPU generation (5 / 6 / 7).  Unknown -> assume tightest VMEM."""
    try:
        kind = jax.devices()[0].device_kind.lower()
    except Exception:
        return 7
    for g in (5, 6, 7):
        if f"v{g}" in kind:
            return g
    return 7


def _vmem_capacity_bytes(gen: int) -> int:
    try:
        cap = int(pltpu.get_tpu_info().vmem_capacity_bytes)
        if cap > 0:
            return cap
    except Exception:
        pass
    return (64 << 20) if gen >= 7 else (128 << 20)


def _vmem_need_bytes(TB, TK, H, Lp, in_bytes):
    """Worst-case VMEM footprint of one pipelined step (double buffers assumed)."""
    return (2 * TB * TK * in_bytes        # x tiles (double-buffered)
            + 2 * TK * H * in_bytes       # w1 tiles (double-buffered)
            + 2 * H * Lp * in_bytes       # w2 (worst case double-buffered)
            + 2 * (H + Lp) * 4            # biases
            + 2 * TB * Lp * 4             # output block (double-buffered)
            + TB * H * 4)                 # f32 accumulator scratch


def _select_tiles(B, H, Lp, gen, in_bytes, vmem_budget):
    """Pick (TB, TK). Priority: max TB (avoid W1 re-stream) > max TK (fewer steps)."""
    Bp8 = _round_up(max(B, 1), 8)

    # K-tile candidates: multiples of 128 that divide H (largest first), gen-capped.
    k_cap = 1024 if gen >= 7 else 2048
    if H % 128 == 0 and H > k_cap:
        tk_cands = [t for t in range(k_cap, 0, -128) if H % t == 0] or [H]
    else:
        tk_cands = [H]

    # Batch-block candidates.
    tb_cap = 512
    if gen >= 7 and Bp8 > tb_cap:
        # Aim for an even number of batch blocks so both v7x TensorCores get work.
        tb_pref = min(tb_cap, _round_up(-(-Bp8 // 2), 8))
    else:
        tb_pref = min(tb_cap, Bp8)
    tb_cands = []
    tb = _round_up(tb_pref, 8)
    while True:
        tb_cands.append(tb)
        if tb <= 8:
            break
        tb = max(8, _round_up(tb // 2, 8))

    for TB in tb_cands:
        for TK in tk_cands:
            if _vmem_need_bytes(TB, TK, H, Lp, in_bytes) <= vmem_budget:
                return TB, TK
    return tb_cands[-1], tk_cands[-1]   # best effort


def _classifier_kernel(x_ref, w1_ref, b1_ref, w2_ref, b2_ref, o_ref, h_acc,
                       *, bf16_epilogue):
    """One (batch-block b, K-tile k) grid step.

    x_ref : (TB, TK)  compute-dtype   CLS activations, K-tile k
    w1_ref: (TK, H)   compute-dtype   dense weight, K-tile k
    b1_ref: (1, H)    f32
    w2_ref: (H, Lp)   compute-dtype   out_proj weight (lane-padded to 128)
    b2_ref: (1, Lp)   f32
    o_ref : (TB, Lp)  f32             lane-dense logits block
    h_acc : (TB, H)   f32             VMEM accumulator for the dense matmul
    """
    k = pl.program_id(1)

    @pl.when(k == 0)
    def _init():
        h_acc[...] = jnp.zeros_like(h_acc)

    # dense: accumulate x @ W1 over K tiles (MXU, f32 accumulate).
    h_acc[...] += jnp.dot(x_ref[...], w1_ref[...],
                          preferred_element_type=jnp.float32)

    @pl.when(k == pl.num_programs(1) - 1)
    def _epilogue():
        h = h_acc[...] + b1_ref[...]
        if bf16_epilogue:
            h = jnp.tanh(h.astype(jnp.bfloat16))     # bf16 EUP path (v6e/v7x)
        else:
            h = jnp.tanh(h)                          # f32 path (v5e: no bf16 EUP)
        # out_proj on a lane-dense, 128-wide (zero-padded) N.
        out = jnp.dot(h.astype(w2_ref.dtype), w2_ref[...],
                      preferred_element_type=jnp.float32)
        o_ref[...] = (out + b2_ref[...]).astype(o_ref.dtype)


def prepare_classifier_params(w1, b1, w2, b2, *, compute_dtype=jnp.bfloat16):
    """One-time (load-time) parameter prep.  Cache the result.

    Casts the matmul weights to `compute_dtype` (bf16 = native MXU width) and
    pads the out_proj weight/bias so the logits dim is lane-dense (multiple of
    128).  Doing this per forward call would roughly quadruple HBM traffic on
    this bandwidth-bound head, so it must NOT live in the per-call path.
    Pass compute_dtype=jnp.float32 for f32-exact logits.
    """
    H, L = w2.shape
    Lp = _round_up(L, 128)
    w1_c = w1.astype(compute_dtype)                                     # (H, H)
    w2_c = jnp.pad(w2.astype(compute_dtype), ((0, 0), (0, Lp - L)))     # (H, Lp)
    b1_c = b1.astype(jnp.float32).reshape(1, H)
    b2_c = jnp.pad(b2.astype(jnp.float32), (0, Lp - L)).reshape(1, Lp)
    return w1_c, b1_c, w2_c, b2_c, int(L)


@functools.partial(jax.jit, static_argnames=("num_labels",))
def classifier_forward(features, w1_c, b1_c, w2_c, b2_c, *, num_labels):
    """features: (B, S, H); params from prepare_classifier_params (cached).

    Returns logits (B, num_labels) in features.dtype.
    """
    B, S, H = features.shape
    Lp = w2_c.shape[1]
    compute_dtype = w1_c.dtype
    in_bytes = jnp.dtype(compute_dtype).itemsize

    gen = _tpu_generation()
    vmem_budget = int(0.75 * _vmem_capacity_bytes(gen))
    TB, TK = _select_tiles(B, H, Lp, gen, in_bytes, vmem_budget)
    Bp = _round_up(B, TB)
    nb, nk = Bp // TB, H // TK
    vmem_need = _vmem_need_bytes(TB, TK, H, Lp, in_bytes)

    # --- per-call prep only touches the tiny (B, H) activation ---
    x = features[:, 0, :]                 # CLS pooling; dropout = identity (eval)
    if Bp != B:
        x = jnp.pad(x, ((0, Bp - B), (0, 0)))
    x = x.astype(compute_dtype)

    compiler_kwargs = dict(dimension_semantics=("parallel", "arbitrary"))
    if vmem_need > (12 << 20):
        compiler_kwargs["vmem_limit_bytes"] = int(
            min(vmem_budget, max(2 * vmem_need, 24 << 20)))

    # Grid-invariant operands: single-buffer on v7x when VMEM is actually tight.
    single_buffer = (gen >= 7) and vmem_need > (12 << 20)

    def _const_spec(shape):
        index_map = lambda b, k: (0,) * len(shape)
        if single_buffer:
            try:
                return pl.BlockSpec(shape, index_map, pipeline_mode=pl.Buffered(1))
            except Exception:
                pass
        return pl.BlockSpec(shape, index_map)

    cost = pl.CostEstimate(
        flops=2 * Bp * H * H + 2 * Bp * H * Lp,
        transcendentals=Bp * H,
        bytes_accessed=(Bp * H * in_bytes + H * H * in_bytes + H * Lp * in_bytes
                        + (H + Lp) * 4 + Bp * Lp * 4),
    )

    kernel = functools.partial(
        _classifier_kernel,
        bf16_epilogue=(gen >= 6 and compute_dtype == jnp.bfloat16))

    out = pl.pallas_call(
        kernel,
        out_shape=jax.ShapeDtypeStruct((Bp, Lp), jnp.float32),
        grid_spec=pltpu.PrefetchScalarGridSpec(
            num_scalar_prefetch=0,
            grid=(nb, nk),                                      # (batch blocks, K tiles)
            in_specs=[
                pl.BlockSpec((TB, TK), lambda b, k: (b, k)),    # x
                pl.BlockSpec((TK, H), lambda b, k: (k, 0)),     # w1 (K tiles)
                _const_spec((1, H)),                            # b1
                _const_spec((H, Lp)),                           # w2 (lane-padded)
                _const_spec((1, Lp)),                           # b2 (lane-padded)
            ],
            out_specs=pl.BlockSpec((TB, Lp), lambda b, k: (b, 0)),
            scratch_shapes=[pltpu.VMEM((TB, H), jnp.float32)],
        ),
        compiler_params=pltpu.CompilerParams(**compiler_kwargs),
        cost_estimate=cost,
    )(x, w1_c, b1_c, w2_c, b2_c)

    # Drop batch / label padding; restore caller dtype.
    return out[:B, :num_labels].astype(features.dtype)


if __name__ == "__main__":
    # Small, module-consistent shapes.
    B, S, H, NUM_LABELS = 2, 8, 32, 4

    key = jax.random.PRNGKey(0)
    k_feat, k_w1, k_b1, k_w2, k_b2 = jax.random.split(key, 5)

    features = jax.random.normal(k_feat, (B, S, H), dtype=jnp.float32)

    # Deterministic synthetic parameters in (in, out) layout.
    scale = 1.0 / jnp.sqrt(jnp.float32(H))
    w1 = jax.random.uniform(k_w1, (H, H), jnp.float32, -scale, scale)
    b1 = jax.random.uniform(k_b1, (H,), jnp.float32, -scale, scale)
    w2 = jax.random.uniform(k_w2, (H, NUM_LABELS), jnp.float32, -scale, scale)
    b2 = jax.random.uniform(k_b2, (NUM_LABELS,), jnp.float32, -scale, scale)

    # One-time parameter prep (cast + lane padding) — cached, NOT per call.
    w1_c, b1_c, w2_c, b2_c, L = prepare_classifier_params(w1, b1, w2, b2)
    w1_c, b1_c, w2_c, b2_c = jax.block_until_ready((w1_c, b1_c, w2_c, b2_c))

    logits = classifier_forward(features, w1_c, b1_c, w2_c, b2_c, num_labels=L)
    logits = jax.block_until_ready(logits)

    # Pure-JAX f32 reference (dropout is identity in eval mode).
    # bf16 MXU operands => slightly looser tolerance than a pure-f32 kernel.
    x_ref = features[:, 0, :]
    ref = jnp.tanh(x_ref @ w1 + b1) @ w2 + b2
    assert logits.shape == (B, NUM_LABELS)
    assert jnp.allclose(logits, ref, atol=2e-2, rtol=2e-2), (
        float(jnp.max(jnp.abs(logits - ref))))

    # TODO(synk): training-mode dropout (RNG masking) is not implemented;
    # eval-mode dropout is the identity, matching the reference forward.
    print("KERNEL_OK")
</pallas_src>

<mosaic_0001>
module attributes {stable_mosaic.version = 11 : i64} {
  func.func @_classifier_kernel(%arg0: i32, %arg1: i32, %arg2: memref<8x32xbf16, #tpu.memory_space<vmem>>, %arg3: memref<32x32xbf16, #tpu.memory_space<vmem>>, %arg4: memref<1x32xf32, #tpu.memory_space<vmem>>, %arg5: memref<32x128xbf16, #tpu.memory_space<vmem>>, %arg6: memref<1x128xf32, #tpu.memory_space<vmem>>, %arg7: memref<8x128xf32, #tpu.memory_space<vmem>>, %arg8: memref<8x32xf32, #tpu.memory_space<vmem>>) attributes {dimension_semantics = [#tpu.dimension_semantics<parallel>, #tpu.dimension_semantics<arbitrary>], iteration_bounds = array<i64: 1, 1>, scalar_prefetch = 0 : i64, scratch_operands = 1 : i64, tpu.core_type = #tpu.core_type<tc>, window_params = [{transform_indices = @transform_0, window_bounds = array<i64: 8, 32>}, {transform_indices = @transform_1, window_bounds = array<i64: 32, 32>}, {pipeline_mode = #tpu.pipeline_mode<synchronous>, transform_indices = @transform_2, window_bounds = array<i64: 1, 32>}, {pipeline_mode = #tpu.pipeline_mode<synchronous>, transform_indices = @transform_3, window_bounds = array<i64: 32, 128>}, {pipeline_mode = #tpu.pipeline_mode<synchronous>, transform_indices = @transform_4, window_bounds = array<i64: 1, 128>}, {transform_indices = @transform_5, window_bounds = array<i64: 8, 128>}]} {
    %c0_i32 = arith.constant 0 : i32
    %0 = arith.cmpi eq, %arg1, %c0_i32 : i32
    %1 = arith.extui %0 : i1 to i32
    %c0_i32_0 = arith.constant 0 : i32
    %2 = arith.cmpi ne, %1, %c0_i32_0 : i32
    scf.if %2 {
      %cst_10 = arith.constant 0.000000e+00 : f32
      %12 = vector.broadcast %cst_10 : f32 to vector<8x32xf32>
      %c0_11 = arith.constant 0 : index
      %c0_12 = arith.constant 0 : index
      %13 = vector.load %arg8[%c0_11, %c0_12] : memref<8x32xf32, #tpu.memory_space<vmem>>, vector<8x32xf32>
      tpu.vector_store %arg8[%c0_11, %c0_12], %12 {strides = array<i32>} : memref<8x32xf32, #tpu.memory_space<vmem>>, vector<8x32xf32>,
    } else {
    }
    %c0 = arith.constant 0 : index
    %c0_1 = arith.constant 0 : index
    %3 = vector.load %arg8[%c0, %c0_1] : memref<8x32xf32, #tpu.memory_space<vmem>>, vector<8x32xf32>
    %c0_2 = arith.constant 0 : index
    %c0_3 = arith.constant 0 : index
    %4 = vector.load %arg2[%c0_2, %c0_3] : memref<8x32xbf16, #tpu.memory_space<vmem>>, vector<8x32xbf16>
    %c0_4 = arith.constant 0 : index
    %c0_5 = arith.constant 0 : index
    %5 = vector.load %arg3[%c0_4, %c0_5] : memref<32x32xbf16, #tpu.memory_space<vmem>>, vector<32x32xbf16>
    %cst = arith.constant dense<0.000000e+00> : vector<8x32xf32>
    %6 = tpu.matmul %4, %5, %cst {dimension_numbers = #tpu.dot_dimension_numbers<[1], [0], [0], [1], [0, 0, 1, 1], [], []>} : vector<8x32xbf16>, vector<32x32xbf16>, vector<8x32xf32> -> vector<8x32xf32>
    %7 = arith.addf %3, %6 : vector<8x32xf32>
    %c0_6 = arith.constant 0 : index
    %c0_7 = arith.constant 0 : index
    %8 = vector.load %arg8[%c0_6, %c0_7] : memref<8x32xf32, #tpu.memory_space<vmem>>, vector<8x32xf32>
    tpu.vector_store %arg8[%c0_6, %c0_7], %7 {strides = array<i32>} : memref<8x32xf32, #tpu.memory_space<vmem>>, vector<8x32xf32>,
    %c0_i32_8 = arith.constant 0 : i32
    %9 = arith.cmpi eq, %arg1, %c0_i32_8 : i32
    %10 = arith.extui %9 : i1 to i32
    %c0_i32_9 = arith.constant 0 : i32
    %11 = arith.cmpi ne, %10, %c0_i32_9 : i32
    scf.if %11 {
      %c0_10 = arith.constant 0 : index
      %c0_11 = arith.constant 0 : index
      %12 = vector.load %arg8[%c0_10, %c0_11] : memref<8x32xf32, #tpu.memory_space<vmem>>, vector<8x32xf32>
      %c0_12 = arith.constant 0 : index
      %c0_13 = arith.constant 0 : index
      %13 = vector.load %arg4[%c0_12, %c0_13] : memref<1x32xf32, #tpu.memory_space<vmem>>, vector<1x32xf32>
      %14 = vector.broadcast %13 : vector<1x32xf32> to vector<8x32xf32>
      %15 = arith.addf %12, %14 : vector<8x32xf32>
      %16 = arith.truncf %15 : vector<8x32xf32> to vector<8x32xbf16>
      %17 = math.tanh %16 : vector<8x32xbf16>
      %c0_14 = arith.constant 0 : index
      %c0_15 = arith.constant 0 : index
      %18 = vector.load %arg5[%c0_14, %c0_15] : memref<32x128xbf16, #tpu.memory_space<vmem>>, vector<32x128xbf16>
      %cst_16 = arith.constant dense<0.000000e+00> : vector<8x128xf32>
      %19 = tpu.matmul %17, %18, %cst_16 {dimension_numbers = #tpu.dot_dimension_numbers<[1], [0], [0], [1], [0, 0, 1, 1], [], []>} : vector<8x32xbf16>, vector<32x128xbf16>, vector<8x128xf32> -> vector<8x128xf32>
      %c0_17 = arith.constant 0 : index
      %c0_18 = arith.constant 0 : index
      %20 = vector.load %arg6[%c0_17, %c0_18] : memref<1x128xf32, #tpu.memory_space<vmem>>, vector<1x128xf32>
      %21 = vector.broadcast %20 : vector<1x128xf32> to vector<8x128xf32>
      %22 = arith.addf %19, %21 : vector<8x128xf32>
      %c0_19 = arith.constant 0 : index
      %c0_20 = arith.constant 0 : index
      %23 = vector.load %arg7[%c0_19, %c0_20] : memref<8x128xf32, #tpu.memory_space<vmem>>, vector<8x128xf32>
      tpu.vector_store %arg7[%c0_19, %c0_20], %22 {strides = array<i32>} : memref<8x128xf32, #tpu.memory_space<vmem>>, vector<8x128xf32>,
    } else {
    }
    return
  }
  func.func @transform_0(%arg0: i32, %arg1: i32) -> (i32, i32) {
    %c0_i32 = arith.constant 0 : i32
    return %arg0, %arg1 : i32, i32
  }
  func.func @transform_1(%arg0: i32, %arg1: i32) -> (i32, i32) {
    %c0_i32 = arith.constant 0 : i32
    %c0_i32_0 = arith.constant 0 : i32
    return %arg1, %c0_i32 : i32, i32
  }
  func.func @transform_2(%arg0: i32, %arg1: i32) -> (i32, i32) {
    %c0_i32 = arith.constant 0 : i32
    %c0_i32_0 = arith.constant 0 : i32
    %c0_i32_1 = arith.constant 0 : i32
    return %c0_i32, %c0_i32_0 : i32, i32
  }
  func.func @transform_3(%arg0: i32, %arg1: i32) -> (i32, i32) {
    %c0_i32 = arith.constant 0 : i32
    %c0_i32_0 = arith.constant 0 : i32
    %c0_i32_1 = arith.constant 0 : i32
    return %c0_i32, %c0_i32_0 : i32, i32
  }
  func.func @transform_4(%arg0: i32, %arg1: i32) -> (i32, i32) {
    %c0_i32 = arith.constant 0 : i32
    %c0_i32_0 = arith.constant 0 : i32
    %c0_i32_1 = arith.constant 0 : i32
    return %c0_i32, %c0_i32_0 : i32, i32
  }
  func.func @transform_5(%arg0: i32, %arg1: i32) -> (i32, i32) {
    %c0_i32 = arith.constant 0 : i32
    %c0_i32_0 = arith.constant 0 : i32
    return %arg0, %c0_i32 : i32, i32
  }
}

</mosaic_0001>

<llo_original>
// kernel: classifier_forward.1
$region0: #{classifier_forward.1}
  #allocation0 [shape = 'u32[]', space=smem, size = 0x4, offset = 0x4, fixed_abs, tag = 'smem constant byte address 0x4 - core index']
  #allocation1 [shape = 'u32[144,128]{1,0:T(1,128)}', space=vmem, size = 0x12000, scoped, tag = 'internal scratch']
  #allocation2 [shape = 'f32[8,32]{1,0:T(8,128)}', space=vmem, size = 0x1000, scoped, tag = 'scratch operand']
  %s0 = inlined_call_operand.vmem [shape: bf16[8,32], index: 0, kind: input, shape index: {}]
  %s1 = inlined_call_operand.vmem [shape: bf16[32,32], index: 1, kind: input, shape index: {}]
  %s2 = inlined_call_operand.vmem [shape: f32[1,32], index: 2, kind: input, shape index: {}]
  %s3 = inlined_call_operand.hbm [shape: bf16[32,128], index: 3, kind: input, shape index: {}]
  %s4 = inlined_call_operand.vmem [shape: f32[1,128], index: 4, kind: input, shape index: {}]
  %s5 = inlined_call_operand.vmem [shape: f32[8,128], index: 5, kind: output, shape index: {}]
  %s6 = sld [smem:[#allocation0]]
  $region42: #{classifier_forward.1} parent=0
    _
  %s8 = ssub.s32 1, %s6
  %s9 = scalar_select 0, %s8, %s6
  $region1: #{classifier_forward.1} parent=0
    #allocation3 [shape = 'u8[8192]{0}', space=vmem, size = 0x2000, scoped, tag = 'input window, operand 3, single buffered']
    #allocation4 [shape = 's32[1]{0}', space=sflag, size = 0x4, scoped, tag = 'scoped memory for classifier_forward.1']
    %10 = vsyncpa [#allocation4], 0
    // Predicated region
    $region2: #{classifier_forward.1} parent=1 // pred_check
      _
    $region3: #{classifier_forward.1} parent=1 // pred_check_branch
      %12 = sbr.rel (0) target = $region5
    $region4: #{classifier_forward.1} parent=1 // pred_region
      _
    $region5: #{classifier_forward.1} parent=1 // pred_fallthru
      _
    // Predicated region
    $region6: #{classifier_forward.1} parent=1 // pred_check
      _
    $region7: #{classifier_forward.1} parent=1 // pred_check_branch
      %14 = sbr.rel (0) target = $region9
    $region8: #{classifier_forward.1} parent=1 // pred_region
      _
    $region9: #{classifier_forward.1} parent=1 // pred_fallthru
      _
    // Predicated region
    $region10: #{classifier_forward.1} parent=1 // pred_check
      _
    $region11: #{classifier_forward.1} parent=1 // pred_check_branch
      %16 = sbr.rel (0) target = $region13
    $region12: #{classifier_forward.1} parent=1 // pred_region
      _
    $region13: #{classifier_forward.1} parent=1 // pred_fallthru
      _
    // Predicated region
    $region14: #{classifier_forward.1} parent=1 // pred_check
      _
    $region15: #{classifier_forward.1} parent=1 // pred_check_branch
      %18 = sbr.rel (0) target = $region17
    $region16: #{classifier_forward.1} parent=1 // pred_region
      %s20 = ssub.s32 256, 256
      %21 = vsyncadd [#allocation4], %s20
      %s22 = sshll.u32 [#allocation3], 4
      %s23 = int_to_ptr.vmem [resolvable:$true] %s22
      %28 = dma.hbm_to_vmem [thread:$0]  %s3, 256, %s23, [#allocation4], 64, 64, 4
    $region17: #{classifier_forward.1} parent=1 // pred_fallthru
      _
    // Predicated region
    $region18: #{classifier_forward.1} parent=1 // pred_check
      _
    $region19: #{classifier_forward.1} parent=1 // pred_check_branch
      %30 = sbr.rel (0) target = $region21
    $region20: #{classifier_forward.1} parent=1 // pred_region
      _
    $region21: #{classifier_forward.1} parent=1 // pred_fallthru
      _
    // Predicated region
    $region22: #{classifier_forward.1} parent=1 // pred_check
      _
    $region23: #{classifier_forward.1} parent=1 // pred_check_branch
      %32 = sbr.rel (0) target = $region25
    $region24: #{classifier_forward.1} parent=1 // pred_region
      %33 = dma.done [#allocation4], 256
    $region25: #{classifier_forward.1} parent=1 // pred_fallthru
      _
    %p35 = scmp.eq.s32.totalorder 0, 0
    // Predicated region
    $region26: #{classifier_forward.1} parent=1 // pred_check
      %p36 = pneg %p35
    $region27: #{classifier_forward.1} parent=1 // pred_check_branch
      %38 = sbr.rel (%p36) target = $region29
    $region28: #{classifier_forward.1} parent=1 // pred_region
      %vm39 = vcmask 261120
      %40 = vst.msk [vmem:[#allocation2] sm:$0xff] %vm39, 0.0
    $region29: #{classifier_forward.1} parent=1 // pred_fallthru
      _
    %v41 = vld [vmem:[#allocation2] sm:$0xff]
    %v42 = vld [vmem:[%s0] sm:$0xf]
    %v43 = vld [vmem:[%s1] sm:$0xf]
    %v44 = vld [vmem:[%s1 + $0x4] sm:$0xf]
    %v45 = vld [vmem:[%s1 + $0x8] sm:$0xf]
    %v46 = vld [vmem:[%s1 + $0xc] sm:$0xf]
    %v51 = vunpack.c.l.b16 %v43
    %v52 = vunpack.c.l.b16 %v44
    %v53 = vunpack.c.l.b16 %v45
    %v54 = vunpack.c.l.b16 %v46
    %v55 = vpack.c.b16 %v52, %v51
    %v56 = vpack.c.b16 %v54, %v53
    %vm59 = vcmask 261120
    %v61 = vsel %vm59, %v42, 0
    %63 = vmatprep.subr.bf16.mxu0 0
    %64 = vmatpush1.bf16.msra.mxu0 %v55
    %65 = vmatprep.subr.bf16.mxu0 0
    %66 = vmatpush1.bf16.msra.mxu0 %v56
    %67 = vmatprep.subr.bf16.mxu0 0
    %68 = vmatpush1.bf16.msra.mxu0 0
    %69 = vmatprep.subr.bf16.mxu0 0
    %70 = vmatpush1.bf16.msra.mxu0 0
    %71 = vmatprep.subr.bf16.mxu0 0
    %72 = vmatpush1.bf16.msra.mxu0 0
    %73 = vmatprep.subr.bf16.mxu0 0
    %74 = vmatpush1.bf16.msra.mxu0 0
    %75 = vmatprep.subr.bf16.mxu0 0
    %76 = vmatpush1.bf16.msra.mxu0 0
    %77 = vmatprep.subr.bf16.mxu0 0
    %78 = vmatpush1.bf16.msra.mxu0 0
    %79 = vmatprep.subr.bf16.mxu0 0
    %80 = vmatpush1.bf16.msra.mxu0 0
    %81 = vmatprep.subr.bf16.mxu0 0
    %82 = vmatpush1.bf16.msra.mxu0 0
    %83 = vmatprep.subr.bf16.mxu0 0
    %84 = vmatpush1.bf16.msra.mxu0 0
    %85 = vmatprep.subr.bf16.mxu0 0
    %86 = vmatpush1.bf16.msra.mxu0 0
    %87 = vmatprep.subr.bf16.mxu0 0
    %88 = vmatpush1.bf16.msra.mxu0 0
    %89 = vmatprep.subr.bf16.mxu0 0
    %90 = vmatpush1.bf16.msra.mxu0 0
    %91 = vmatprep.subr.bf16.mxu0 0
    %92 = vmatpush1.bf16.msra.mxu0 0
    %93 = vmatprep.subr.bf16.mxu0 0
    %94 = vmatpush1.bf16.msra.mxu0 0
    %95 = vmatprep.mubr.bf16.mxu0 0
    %96 = vmatmul.mubr.bf16.gmra.mrb[0].mxu0 %v61
    %v97 = vpop.f32.mrb[0].mxu0
    %v98 = vadd.f32 0.0, %v97
    %v99 = vpop.f32.mrb[0].mxu0
    %v100 = vpop.f32.mrb[0].mxu0
    %v101 = vpop.f32.mrb[0].mxu0
    %102 = vdwg.mxu0
    %v103 = vadd.f32 %v41, %v98
    %104 = vst.msk [vmem:[#allocation2] sm:$0xff] %vm59, %v103
    // Predicated region
    $region30: #{classifier_forward.1} parent=1 // pred_check
      %p105 = pneg %p35
    $region31: #{classifier_forward.1} parent=1 // pred_check_branch
      %107 = sbr.rel (%p105) target = $region33
    $region32: #{classifier_forward.1} parent=1 // pred_region
      %v108 = vld [vmem:[#allocation2] sm:$0xff]
      %v109 = vld [vmem:[%s2] sm:$0x1]
      %v111 = vlaneseq
      %v112 = vshrl.u32 %v111, 7
      %v113 = vsub.s32 0, %v112
      %v114 = vrot.slane %v109, %v113
      %v116 = vadd.f32 %v108, %v114
      %v117 = vpack.c.bf16 %v116, %v116
      %v118 = vtanh.bf16.pop %v117
      %v119 = vld [vmem:[#allocation3] sm:$0xf]
      %v120 = vld [vmem:[#allocation3 + $0x4] sm:$0xf]
      %v121 = vld [vmem:[#allocation3 + $0x8] sm:$0xf]
      %v122 = vld [vmem:[#allocation3 + $0xc] sm:$0xf]
      %v123 = vld [vmem:[%s4] sm:$0x1]
      %v125 = vlaneseq
      %v126 = vshrl.u32 %v125, 7
      %v127 = vsub.s32 0, %v126
      %v128 = vrot.slane %v123, %v127
      %v134 = vunpack.c.l.b16 %v119
      %v135 = vunpack.c.l.b16 %v120
      %v136 = vunpack.c.l.b16 %v121
      %v137 = vunpack.c.l.b16 %v122
      %v138 = vpack.c.b16 %v135, %v134
      %v139 = vpack.c.b16 %v137, %v136
      %v143 = vsel %vm59, %v118, 0
      %145 = vmatprep.subr.bf16.mxu0 0
      %146 = vmatpush1.bf16.msra.mxu0 %v138
      %147 = vmatprep.subr.bf16.mxu0 0
      %148 = vmatpush1.bf16.msra.mxu0 %v139
      %149 = vmatprep.subr.bf16.mxu0 0
      %150 = vmatpush1.bf16.msra.mxu0 0
      %151 = vmatprep.subr.bf16.mxu0 0
      %152 = vmatpush1.bf16.msra.mxu0 0
      %153 = vmatprep.subr.bf16.mxu0 0
      %154 = vmatpush1.bf16.msra.mxu0 0
      %155 = vmatprep.subr.bf16.mxu0 0
      %156 = vmatpush1.bf16.msra.mxu0 0
      %157 = vmatprep.subr.bf16.mxu0 0
      %158 = vmatpush1.bf16.msra.mxu0 0
      %159 = vmatprep.subr.bf16.mxu0 0
      %160 = vmatpush1.bf16.msra.mxu0 0
      %161 = vmatprep.subr.bf16.mxu0 0
      %162 = vmatpush1.bf16.msra.mxu0 0
      %163 = vmatprep.subr.bf16.mxu0 0
      %164 = vmatpush1.bf16.msra.mxu0 0
      %165 = vmatprep.subr.bf16.mxu0 0
      %166 = vmatpush1.bf16.msra.mxu0 0
      %167 = vmatprep.subr.bf16.mxu0 0
      %168 = vmatpush1.bf16.msra.mxu0 0
      %169 = vmatprep.subr.bf16.mxu0 0
      %170 = vmatpush1.bf16.msra.mxu0 0
      %171 = vmatprep.subr.bf16.mxu0 0
      %172 = vmatpush1.bf16.msra.mxu0 0
      %173 = vmatprep.subr.bf16.mxu0 0
      %174 = vmatpush1.bf16.msra.mxu0 0
      %175 = vmatprep.subr.bf16.mxu0 0
      %176 = vmatpush1.bf16.msra.mxu0 0
      %177 = vmatprep.mubr.bf16.mxu0 0
      %178 = vmatmul.mubr.bf16.gmra.mrb[0].mxu0 %v143
      %v179 = vpop.f32.mrb[0].mxu0
      %v180 = vadd.f32 %v128, %v179
      %v181 = vpop.f32.mrb[0].mxu0
      %v182 = vpop.f32.mrb[0].mxu0
      %v183 = vpop.f32.mrb[0].mxu0
      %184 = vdwg.mxu0
      %185 = vst [vmem:[%s5] sm:$0xff] %v180
    $region33: #{classifier_forward.1} parent=1 // pred_fallthru
      _
    // Predicated region
    $region34: #{classifier_forward.1} parent=1 // pred_check
      _
    $region35: #{classifier_forward.1} parent=1 // pred_check_branch
      %187 = sbr.rel (0) target = $region37
    $region36: #{classifier_forward.1} parent=1 // pred_region
      _
    $region37: #{classifier_forward.1} parent=1 // pred_fallthru
      _
    // Predicated region
    $region38: #{classifier_forward.1} parent=1 // pred_check
      _
    $region39: #{classifier_forward.1} parent=1 // pred_check_branch
      %189 = sbr.rel (0) target = $region41
    $region40: #{classifier_forward.1} parent=1 // pred_region
      _
    $region41: #{classifier_forward.1} parent=1 // pred_fallthru
      _
    %190 = vsyncpa [#allocation4], 1

</llo_original>
